<compile_context>
chip_gen: v7x
topology: tpu7x:2x2x1
jax: 0.10.0
libtpu: 0.0.40
codegen_flags: <defaults>
</compile_context>

<pallas_src>
import jax
import jax.numpy as jnp
from jax.experimental import pallas as pl
from jax.experimental.pallas import tpu as pltpu

IN_DIM = 14 * 14      # 196
HID_DIM = 20
OUT_DIM = 10

H_PAD = 128           # hidden 20 -> 128 (resident weights only; free)
TB_PREF = 4096        # preferred rows per grid step
MIN_ROWS = 8          # f32 sublane granularity for the streamed x tile


def _round_up(n, m):
    return ((n + m - 1) // m) * m


def mlp_kernel(x_ref, w1_ref, b1_ref, w2_ref, b2_ref, o_ref):
    # Stream x as f32 straight from HBM; cast to bf16 in-register for the MXU.
    x = x_ref[...].astype(jnp.bfloat16)
    # fc1: (TB,196) @ (196,128), f32 accumulate; bias + ReLU in f32 on the VPU.
    h = jnp.dot(x, w1_ref[...], preferred_element_type=jnp.float32)
    h = jnp.maximum(h + b1_ref[...], 0.0)
    # fc2: (TB,128) @ (128,10), f32 accumulate; narrow 10-lane result.
    y = jnp.dot(h.astype(jnp.bfloat16), w2_ref[...],
                preferred_element_type=jnp.float32)
    o_ref[...] = jnp.maximum(y + b2_ref[...], 0.0)


def prepare_params(w1, b1, w2, b2):
    """Pad/cast PyTorch-convention params ONCE at init time.

    w1: (196, 20), b1: (20,), w2: (20, 10), b2: (10,)  [already transposed to
    (in, out) so the kernel computes y = x @ W + b].
    Only the resident weights are padded (hidden 20 -> 128); the streamed x
    and the output stay at their natural widths.
    """
    w1p = (jnp.zeros((IN_DIM, H_PAD), jnp.float32)
           .at[:, :HID_DIM].set(w1).astype(jnp.bfloat16))        # (196, 128) bf16
    b1p = jnp.zeros((1, H_PAD), jnp.float32).at[0, :HID_DIM].set(b1)
    w2p = (jnp.zeros((H_PAD, OUT_DIM), jnp.float32)
           .at[:HID_DIM, :].set(w2).astype(jnp.bfloat16))        # (128, 10) bf16
    b2p = b2.reshape(1, OUT_DIM).astype(jnp.float32)
    return w1p, b1p, w2p, b2p


def net_forward(x, w1p, b1p, w2p, b2p):
    """x: (B, 196) f32 (natural layout, no wrapper pad/cast).  Returns (B, 10) f32."""
    B = x.shape[0]

    # Tight tile selection: no HBM-side batch padding; the (at most 7-row)
    # ragged tail is handled by Pallas' masked boundary block.
    num_tiles = max(1, pl.cdiv(B, TB_PREF))
    if num_tiles == 1 and B >= 2 * MIN_ROWS:
        num_tiles = 2                     # v7x: feed both TensorCores
    TB = _round_up(pl.cdiv(B, num_tiles), MIN_ROWS)
    grid = (pl.cdiv(B, TB),)

    return pl.pallas_call(
        mlp_kernel,
        out_shape=jax.ShapeDtypeStruct((B, OUT_DIM), jnp.float32),
        grid=grid,
        in_specs=[
            pl.BlockSpec((TB, IN_DIM), lambda i: (i, 0)),       # streamed x tile (f32)
            pl.BlockSpec((IN_DIM, H_PAD), lambda i: (0, 0)),    # resident W1 (bf16)
            pl.BlockSpec((1, H_PAD), lambda i: (0, 0)),         # resident b1 (f32)
            pl.BlockSpec((H_PAD, OUT_DIM), lambda i: (0, 0)),   # resident W2 (bf16)
            pl.BlockSpec((1, OUT_DIM), lambda i: (0, 0)),       # resident b2 (f32)
        ],
        out_specs=pl.BlockSpec((TB, OUT_DIM), lambda i: (i, 0)),
        compiler_params=pltpu.CompilerParams(
            dimension_semantics=("parallel",),   # batch axis splits across TCs
        ),
    )(x, w1p, b1p, w2p, b2p)


def init_params(key):
    # Deterministic init mimicking PyTorch's default Linear init
    # (uniform(-1/sqrt(fan_in), 1/sqrt(fan_in))).  Weights stored (in, out).
    k1, k2, k3, k4 = jax.random.split(key, 4)
    bound1 = 1.0 / jnp.sqrt(IN_DIM)
    bound2 = 1.0 / jnp.sqrt(HID_DIM)
    w1 = jax.random.uniform(k1, (IN_DIM, HID_DIM), jnp.float32, -bound1, bound1)
    b1 = jax.random.uniform(k2, (HID_DIM,), jnp.float32, -bound1, bound1)
    w2 = jax.random.uniform(k3, (HID_DIM, OUT_DIM), jnp.float32, -bound2, bound2)
    b2 = jax.random.uniform(k4, (OUT_DIM,), jnp.float32, -bound2, bound2)
    return w1, b1, w2, b2


def _reference(x, w1, b1, w2, b2, bf16=False):
    """Plain-JAX reference of the PyTorch forward pass."""
    if bf16:
        xd = x.astype(jnp.bfloat16)
        w1d = w1.astype(jnp.bfloat16)
        w2d = w2.astype(jnp.bfloat16)
        h = jnp.maximum(
            jnp.dot(xd, w1d, preferred_element_type=jnp.float32) + b1, 0.0)
        y = jnp.dot(h.astype(jnp.bfloat16), w2d,
                    preferred_element_type=jnp.float32) + b2
        return jnp.maximum(y, 0.0)
    return jnp.maximum(jnp.maximum(x @ w1 + b1, 0.0) @ w2 + b2, 0.0)


if __name__ == "__main__":
    key = jax.random.PRNGKey(0)
    pkey, xkey, xkey2 = jax.random.split(key, 3)
    w1, b1, w2, b2 = init_params(pkey)
    w1p, b1p, w2p, b2p = prepare_params(w1, b1, w2, b2)

    # Small example batch (single full block, no masking).
    B = 8
    x = jax.random.normal(xkey, (B, IN_DIM), jnp.float32)
    out = net_forward(x, w1p, b1p, w2p, b2p)
    jax.block_until_ready(out)
    assert out.shape == (B, OUT_DIM)
    ref_bf16 = _reference(x, w1, b1, w2, b2, bf16=True)
    ref_f32 = _reference(x, w1, b1, w2, b2, bf16=False)
    assert jnp.allclose(out, ref_bf16, atol=2e-3, rtol=2e-3)
    assert jnp.allclose(out, ref_f32, atol=5e-2, rtol=5e-2)

    # Larger batch: exercises the multi-tile grid and the masked boundary
    # block (600 rows -> 2 tiles of 304 rows, last one partially valid).
    B2 = 600
    x2 = jax.random.normal(xkey2, (B2, IN_DIM), jnp.float32)
    out2 = net_forward(x2, w1p, b1p, w2p, b2p)
    jax.block_until_ready(out2)
    assert out2.shape == (B2, OUT_DIM)
    ref2 = _reference(x2, w1, b1, w2, b2, bf16=True)
    assert jnp.allclose(out2, ref2, atol=2e-3, rtol=2e-3)

    print("KERNEL_OK")
</pallas_src>

<mosaic_0001>
module attributes {stable_mosaic.version = 11 : i64} {
  func.func @mlp_kernel(%arg0: i32, %arg1: memref<8x196xf32, #tpu.memory_space<vmem>>, %arg2: memref<196x128xbf16, #tpu.memory_space<vmem>>, %arg3: memref<1x128xf32, #tpu.memory_space<vmem>>, %arg4: memref<128x10xbf16, #tpu.memory_space<vmem>>, %arg5: memref<1x10xf32, #tpu.memory_space<vmem>>, %arg6: memref<8x10xf32, #tpu.memory_space<vmem>>) attributes {dimension_semantics = [#tpu.dimension_semantics<parallel>], iteration_bounds = array<i64: 1>, scalar_prefetch = 0 : i64, scratch_operands = 0 : i64, tpu.core_type = #tpu.core_type<tc>, window_params = [{transform_indices = @transform_0, window_bounds = array<i64: 8, 196>}, {pipeline_mode = #tpu.pipeline_mode<synchronous>, transform_indices = @transform_1, window_bounds = array<i64: 196, 128>}, {pipeline_mode = #tpu.pipeline_mode<synchronous>, transform_indices = @transform_2, window_bounds = array<i64: 1, 128>}, {pipeline_mode = #tpu.pipeline_mode<synchronous>, transform_indices = @transform_3, window_bounds = array<i64: 128, 10>}, {pipeline_mode = #tpu.pipeline_mode<synchronous>, transform_indices = @transform_4, window_bounds = array<i64: 1, 10>}, {transform_indices = @transform_5, window_bounds = array<i64: 8, 10>}]} {
    %c0 = arith.constant 0 : index
    %c0_0 = arith.constant 0 : index
    %0 = vector.load %arg1[%c0, %c0_0] : memref<8x196xf32, #tpu.memory_space<vmem>>, vector<8x196xf32>
    %1 = arith.truncf %0 : vector<8x196xf32> to vector<8x196xbf16>
    %c0_1 = arith.constant 0 : index
    %c0_2 = arith.constant 0 : index
    %2 = vector.load %arg2[%c0_1, %c0_2] : memref<196x128xbf16, #tpu.memory_space<vmem>>, vector<196x128xbf16>
    %cst = arith.constant dense<0.000000e+00> : vector<8x128xf32>
    %3 = tpu.matmul %1, %2, %cst {dimension_numbers = #tpu.dot_dimension_numbers<[1], [0], [0], [1], [0, 0, 1, 1], [], []>} : vector<8x196xbf16>, vector<196x128xbf16>, vector<8x128xf32> -> vector<8x128xf32>
    %c0_3 = arith.constant 0 : index
    %c0_4 = arith.constant 0 : index
    %4 = vector.load %arg3[%c0_3, %c0_4] : memref<1x128xf32, #tpu.memory_space<vmem>>, vector<1x128xf32>
    %5 = vector.broadcast %4 : vector<1x128xf32> to vector<8x128xf32>
    %6 = arith.addf %3, %5 : vector<8x128xf32>
    %cst_5 = arith.constant 0.000000e+00 : f32
    %7 = vector.broadcast %cst_5 : f32 to vector<8x128xf32>
    %8 = arith.maximumf %6, %7 : vector<8x128xf32>
    %9 = arith.truncf %8 : vector<8x128xf32> to vector<8x128xbf16>
    %c0_6 = arith.constant 0 : index
    %c0_7 = arith.constant 0 : index
    %10 = vector.load %arg4[%c0_6, %c0_7] : memref<128x10xbf16, #tpu.memory_space<vmem>>, vector<128x10xbf16>
    %cst_8 = arith.constant dense<0.000000e+00> : vector<8x10xf32>
    %11 = tpu.matmul %9, %10, %cst_8 {dimension_numbers = #tpu.dot_dimension_numbers<[1], [0], [0], [1], [0, 0, 1, 1], [], []>} : vector<8x128xbf16>, vector<128x10xbf16>, vector<8x10xf32> -> vector<8x10xf32>
    %c0_9 = arith.constant 0 : index
    %c0_10 = arith.constant 0 : index
    %12 = vector.load %arg5[%c0_9, %c0_10] : memref<1x10xf32, #tpu.memory_space<vmem>>, vector<1x10xf32>
    %13 = vector.broadcast %12 : vector<1x10xf32> to vector<8x10xf32>
    %14 = arith.addf %11, %13 : vector<8x10xf32>
    %cst_11 = arith.constant 0.000000e+00 : f32
    %15 = vector.broadcast %cst_11 : f32 to vector<8x10xf32>
    %16 = arith.maximumf %14, %15 : vector<8x10xf32>
    %c0_12 = arith.constant 0 : index
    %c0_13 = arith.constant 0 : index
    %17 = vector.load %arg6[%c0_12, %c0_13] : memref<8x10xf32, #tpu.memory_space<vmem>>, vector<8x10xf32>
    tpu.vector_store %arg6[%c0_12, %c0_13], %16 {strides = array<i32>} : memref<8x10xf32, #tpu.memory_space<vmem>>, vector<8x10xf32>,
    return
  }
  func.func @transform_0(%arg0: i32) -> (i32, i32) {
    %c0_i32 = arith.constant 0 : i32
    %c0_i32_0 = arith.constant 0 : i32
    return %arg0, %c0_i32 : i32, i32
  }
  func.func @transform_1(%arg0: i32) -> (i32, i32) {
    %c0_i32 = arith.constant 0 : i32
    %c0_i32_0 = arith.constant 0 : i32
    %c0_i32_1 = arith.constant 0 : i32
    return %c0_i32, %c0_i32_0 : i32, i32
  }
  func.func @transform_2(%arg0: i32) -> (i32, i32) {
    %c0_i32 = arith.constant 0 : i32
    %c0_i32_0 = arith.constant 0 : i32
    %c0_i32_1 = arith.constant 0 : i32
    return %c0_i32, %c0_i32_0 : i32, i32
  }
  func.func @transform_3(%arg0: i32) -> (i32, i32) {
    %c0_i32 = arith.constant 0 : i32
    %c0_i32_0 = arith.constant 0 : i32
    %c0_i32_1 = arith.constant 0 : i32
    return %c0_i32, %c0_i32_0 : i32, i32
  }
  func.func @transform_4(%arg0: i32) -> (i32, i32) {
    %c0_i32 = arith.constant 0 : i32
    %c0_i32_0 = arith.constant 0 : i32
    %c0_i32_1 = arith.constant 0 : i32
    return %c0_i32, %c0_i32_0 : i32, i32
  }
  func.func @transform_5(%arg0: i32) -> (i32, i32) {
    %c0_i32 = arith.constant 0 : i32
    %c0_i32_0 = arith.constant 0 : i32
    return %arg0, %c0_i32 : i32, i32
  }
}

</mosaic_0001>

<llo_original>
// kernel: tpu_custom_call.1
$region0: #{tpu_custom_call.1}
  #allocation0 [shape = 'u32[]', space=smem, size = 0x4, offset = 0x4, fixed_abs, tag = 'smem constant byte address 0x4 - core index']
  #allocation1 [shape = 'u32[144,128]{1,0:T(1,128)}', space=vmem, size = 0x12000, scoped, tag = 'internal scratch']
  %s0 = inlined_call_operand.vmem [shape: f32[8,196], index: 0, kind: input, shape index: {}]
  %s1 = inlined_call_operand.hbm [shape: bf16[196,128], index: 1, kind: input, shape index: {}]
  %s2 = inlined_call_operand.vmem [shape: f32[1,128], index: 2, kind: input, shape index: {}]
  %s3 = inlined_call_operand.vmem [shape: bf16[128,10], index: 3, kind: input, shape index: {}]
  %s4 = inlined_call_operand.vmem [shape: f32[1,10], index: 4, kind: input, shape index: {}]
  %s5 = inlined_call_operand.hbm [shape: f32[8,10], index: 5, kind: output, shape index: {}]
  %s6 = sld [smem:[#allocation0]]
  $region34: #{tpu_custom_call.1} parent=0
    _
  %s8 = ssub.s32 1, %s6
  %s9 = scalar_select 0, %s8, %s6
  $region1: #{tpu_custom_call.1} parent=0
    #allocation2 [shape = 'u8[51200]{0}', space=vmem, size = 0xc800, scoped, tag = 'input window, operand 1, single buffered']
    #allocation3 [shape = 's32[1]{0}', space=sflag, size = 0x4, scoped, tag = 'scoped memory for tpu_custom_call.1']
    #allocation4 [shape = 's32[1]{0}', space=sflag, size = 0x4, scoped, tag = 'scoped memory for tpu_custom_call.1']
    #allocation5 [shape = 'u8[4096]{0}', space=vmem, size = 0x1000, scoped, tag = 'output window, operand 0, single buffered']
    %10 = vsyncpa [#allocation3], 0
    %11 = vsyncpa [#allocation4], 0
    // Predicated region
    $region2: #{tpu_custom_call.1} parent=1 // pred_check
      _
    $region3: #{tpu_custom_call.1} parent=1 // pred_check_branch
      %13 = sbr.rel (0) target = $region5
    $region4: #{tpu_custom_call.1} parent=1 // pred_region
      _
    $region5: #{tpu_custom_call.1} parent=1 // pred_fallthru
      _
    // Predicated region
    $region6: #{tpu_custom_call.1} parent=1 // pred_check
      _
    $region7: #{tpu_custom_call.1} parent=1 // pred_check_branch
      %15 = sbr.rel (0) target = $region9
    $region8: #{tpu_custom_call.1} parent=1 // pred_region
      %s17 = ssub.s32 1600, 1600
      %18 = vsyncadd [#allocation3], %s17
      %s19 = sshll.u32 [#allocation2], 4
      %s20 = int_to_ptr.vmem [resolvable:$true] %s19
      %25 = dma.hbm_to_vmem [thread:$0]  %s1, 1600, %s20, [#allocation3], 64, 64, 4
    $region9: #{tpu_custom_call.1} parent=1 // pred_fallthru
      _
    // Predicated region
    $region10: #{tpu_custom_call.1} parent=1 // pred_check
      _
    $region11: #{tpu_custom_call.1} parent=1 // pred_check_branch
      %27 = sbr.rel (0) target = $region13
    $region12: #{tpu_custom_call.1} parent=1 // pred_region
      _
    $region13: #{tpu_custom_call.1} parent=1 // pred_fallthru
      _
    // Predicated region
    $region14: #{tpu_custom_call.1} parent=1 // pred_check
      _
    $region15: #{tpu_custom_call.1} parent=1 // pred_check_branch
      %29 = sbr.rel (0) target = $region17
    $region16: #{tpu_custom_call.1} parent=1 // pred_region
      _
    $region17: #{tpu_custom_call.1} parent=1 // pred_fallthru
      _
    // Predicated region
    $region18: #{tpu_custom_call.1} parent=1 // pred_check
      _
    $region19: #{tpu_custom_call.1} parent=1 // pred_check_branch
      %31 = sbr.rel (0) target = $region21
    $region20: #{tpu_custom_call.1} parent=1 // pred_region
      _
    $region21: #{tpu_custom_call.1} parent=1 // pred_fallthru
      _
    // Predicated region
    $region22: #{tpu_custom_call.1} parent=1 // pred_check
      _
    $region23: #{tpu_custom_call.1} parent=1 // pred_check_branch
      %33 = sbr.rel (0) target = $region25
    $region24: #{tpu_custom_call.1} parent=1 // pred_region
      %34 = dma.done [#allocation3], 1600
    $region25: #{tpu_custom_call.1} parent=1 // pred_fallthru
      _
    %v36 = vld [vmem:[%s0] sm:$0xff]
    %v37 = vld [vmem:[%s0 + $0x8] sm:$0xff]
    %v38 = vpack.c.bf16 %v36, %v36
    %v39 = vpack.c.bf16 %v37, %v37
    %v40 = vld [vmem:[#allocation2] sm:$0xf]
    %v41 = vld [vmem:[#allocation2 + $0x4] sm:$0xf]
    %v42 = vld [vmem:[#allocation2 + $0x8] sm:$0xf]
    %v43 = vld [vmem:[#allocation2 + $0xc] sm:$0xf]
    %v44 = vld [vmem:[#allocation2 + $0x10] sm:$0xf]
    %v45 = vld [vmem:[#allocation2 + $0x14] sm:$0xf]
    %v46 = vld [vmem:[#allocation2 + $0x18] sm:$0xf]
    %v47 = vld [vmem:[#allocation2 + $0x1c] sm:$0xf]
    %v48 = vld [vmem:[#allocation2 + $0x20] sm:$0xf]
    %v49 = vld [vmem:[#allocation2 + $0x24] sm:$0xf]
    %v50 = vld [vmem:[#allocation2 + $0x28] sm:$0xf]
    %v51 = vld [vmem:[#allocation2 + $0x2c] sm:$0xf]
    %v52 = vld [vmem:[#allocation2 + $0x30] sm:$0xf]
    %v53 = vld [vmem:[#allocation2 + $0x34] sm:$0xf]
    %v54 = vld [vmem:[#allocation2 + $0x38] sm:$0xf]
    %v55 = vld [vmem:[#allocation2 + $0x3c] sm:$0xf]
    %v56 = vld [vmem:[#allocation2 + $0x40] sm:$0xf]
    %v57 = vld [vmem:[#allocation2 + $0x44] sm:$0xf]
    %v58 = vld [vmem:[#allocation2 + $0x48] sm:$0xf]
    %v59 = vld [vmem:[#allocation2 + $0x4c] sm:$0xf]
    %v60 = vld [vmem:[#allocation2 + $0x50] sm:$0xf]
    %v61 = vld [vmem:[#allocation2 + $0x54] sm:$0xf]
    %v62 = vld [vmem:[#allocation2 + $0x58] sm:$0xf]
    %v63 = vld [vmem:[#allocation2 + $0x5c] sm:$0xf]
    %v64 = vld [vmem:[#allocation2 + $0x60] sm:$0x3]
    %v65 = vld [vmem:[%s2] sm:$0x1]
    %v67 = vlaneseq
    %v68 = vshrl.u32 %v67, 7
    %v69 = vsub.s32 0, %v68
    %v70 = vrot.slane %v65, %v69
    %v97 = vunpack.c.l.b16 %v40
    %v98 = vunpack.c.l.b16 %v41
    %v99 = vunpack.c.l.b16 %v42
    %v100 = vunpack.c.l.b16 %v43
    %v101 = vunpack.c.l.b16 %v44
    %v102 = vunpack.c.l.b16 %v45
    %v103 = vunpack.c.l.b16 %v46
    %v104 = vunpack.c.l.b16 %v47
    %v105 = vunpack.c.l.b16 %v48
    %v106 = vunpack.c.l.b16 %v49
    %v107 = vunpack.c.l.b16 %v50
    %v108 = vunpack.c.l.b16 %v51
    %v109 = vunpack.c.l.b16 %v52
    %v110 = vunpack.c.l.b16 %v53
    %v111 = vunpack.c.l.b16 %v54
    %v112 = vunpack.c.l.b16 %v55
    %v113 = vunpack.c.l.b16 %v56
    %v114 = vunpack.c.l.b16 %v57
    %v115 = vunpack.c.l.b16 %v58
    %v116 = vunpack.c.l.b16 %v59
    %v117 = vunpack.c.l.b16 %v60
    %v118 = vunpack.c.l.b16 %v61
    %v119 = vunpack.c.l.b16 %v62
    %v120 = vunpack.c.l.b16 %v63
    %v121 = vunpack.c.l.b16 %v64
    %v122 = vpack.c.b16 %v98, %v97
    %v123 = vpack.c.b16 %v100, %v99
    %v124 = vpack.c.b16 %v102, %v101
    %v125 = vpack.c.b16 %v104, %v103
    %v126 = vpack.c.b16 %v106, %v105
    %v127 = vpack.c.b16 %v108, %v107
    %v128 = vpack.c.b16 %v110, %v109
    %v129 = vpack.c.b16 %v112, %v111
    %v130 = vpack.c.b16 %v114, %v113
    %v131 = vpack.c.b16 %v116, %v115
    %v132 = vpack.c.b16 %v118, %v117
    %v133 = vpack.c.b16 %v120, %v119
    %v134 = vpack.c.b16 %v121, %v121
    %vm147 = vcmask 556032
    %v149 = vsel %vm147, %v39, 0
    %vm151 = vcmask 1041408
    %v153 = vsel %vm151, %v134, 0
    %155 = vmatprep.subr.bf16.mxu0 0
    %156 = vmatpush1.bf16.msra.mxu0 %v122
    %157 = vmatprep.subr.bf16.mxu0 0
    %158 = vmatpush1.bf16.msra.mxu0 %v123
    %159 = vmatprep.subr.bf16.mxu0 0
    %160 = vmatpush1.bf16.msra.mxu0 %v124
    %161 = vmatprep.subr.bf16.mxu0 0
    %162 = vmatpush1.bf16.msra.mxu0 %v125
    %163 = vmatprep.subr.bf16.mxu0 0
    %164 = vmatpush1.bf16.msra.mxu0 %v126
    %165 = vmatprep.subr.bf16.mxu0 0
    %166 = vmatpush1.bf16.msra.mxu0 %v127
    %167 = vmatprep.subr.bf16.mxu0 0
    %168 = vmatpush1.bf16.msra.mxu0 %v128
    %169 = vmatprep.subr.bf16.mxu0 0
    %170 = vmatpush1.bf16.msra.mxu0 %v129
    %171 = vmatprep.subr.bf16.mxu0 0
    %172 = vmatpush1.bf16.msra.mxu0 %v130
    %173 = vmatprep.subr.bf16.mxu0 0
    %174 = vmatpush1.bf16.msra.mxu0 %v131
    %175 = vmatprep.subr.bf16.mxu0 0
    %176 = vmatpush1.bf16.msra.mxu0 %v132
    %177 = vmatprep.subr.bf16.mxu0 0
    %178 = vmatpush1.bf16.msra.mxu0 %v133
    %179 = vmatprep.subr.bf16.mxu0 0
    %180 = vmatpush1.bf16.msra.mxu0 %v153
    %181 = vmatprep.subr.bf16.mxu0 0
    %182 = vmatpush1.bf16.msra.mxu0 0
    %183 = vmatprep.subr.bf16.mxu0 0
    %184 = vmatpush1.bf16.msra.mxu0 0
    %185 = vmatprep.subr.bf16.mxu0 0
    %186 = vmatpush1.bf16.msra.mxu0 0
    %187 = vmatprep.mubr.bf16.mxu0 %v149
    %188 = vmatmul.mubr.bf16.gmra.mrb[0].mxu0 %v38
    %v189 = vpop.f32.mrb[0].mxu0
    %v190 = vadd.f32 %v70, %v189
    %v191 = vpop.f32.mrb[0].mxu0
    %v192 = vpop.f32.mrb[0].mxu0
    %v193 = vpop.f32.mrb[0].mxu0
    %194 = vdwg.mxu0
    %v195 = vmax.f32 %v190, 0.0
    %v196 = vpack.c.bf16 %v195, %v195
    %v197 = vld [vmem:[%s3] sm:$0xf]
    %v198 = vld [vmem:[%s3 + $0x4] sm:$0xf]
    %v199 = vld [vmem:[%s3 + $0x8] sm:$0xf]
    %v200 = vld [vmem:[%s3 + $0xc] sm:$0xf]
    %v201 = vld [vmem:[%s3 + $0x10] sm:$0xf]
    %v202 = vld [vmem:[%s3 + $0x14] sm:$0xf]
    %v203 = vld [vmem:[%s3 + $0x18] sm:$0xf]
    %v204 = vld [vmem:[%s3 + $0x1c] sm:$0xf]
    %v205 = vld [vmem:[%s3 + $0x20] sm:$0xf]
    %v206 = vld [vmem:[%s3 + $0x24] sm:$0xf]
    %v207 = vld [vmem:[%s3 + $0x28] sm:$0xf]
    %v208 = vld [vmem:[%s3 + $0x2c] sm:$0xf]
    %v209 = vld [vmem:[%s3 + $0x30] sm:$0xf]
    %v210 = vld [vmem:[%s3 + $0x34] sm:$0xf]
    %v211 = vld [vmem:[%s3 + $0x38] sm:$0xf]
    %v212 = vld [vmem:[%s3 + $0x3c] sm:$0xf]
    %v213 = vld [vmem:[%s4] sm:$0x1]
    %v215 = vlaneseq
    %v216 = vshrl.u32 %v215, 7
    %v217 = vsub.s32 0, %v216
    %v218 = vrot.slane %v213, %v217
    %v236 = vunpack.c.l.b16 %v197
    %v237 = vunpack.c.l.b16 %v198
    %v238 = vunpack.c.l.b16 %v199
    %v239 = vunpack.c.l.b16 %v200
    %v240 = vunpack.c.l.b16 %v201
    %v241 = vunpack.c.l.b16 %v202
    %v242 = vunpack.c.l.b16 %v203
    %v243 = vunpack.c.l.b16 %v204
    %v244 = vunpack.c.l.b16 %v205
    %v245 = vunpack.c.l.b16 %v206
    %v246 = vunpack.c.l.b16 %v207
    %v247 = vunpack.c.l.b16 %v208
    %v248 = vunpack.c.l.b16 %v209
    %v249 = vunpack.c.l.b16 %v210
    %v250 = vunpack.c.l.b16 %v211
    %v251 = vunpack.c.l.b16 %v212
    %v252 = vpack.c.b16 %v237, %v236
    %v253 = vpack.c.b16 %v239, %v238
    %v254 = vpack.c.b16 %v241, %v240
    %v255 = vpack.c.b16 %v243, %v242
    %v256 = vpack.c.b16 %v245, %v244
    %v257 = vpack.c.b16 %v247, %v246
    %v258 = vpack.c.b16 %v249, %v248
    %v259 = vpack.c.b16 %v251, %v250
    %268 = vmatprep.subr.bf16.mxu0 0
    %269 = vmatpush1.bf16.msra.mxu0 %v252
    %270 = vmatprep.subr.bf16.mxu0 0
    %271 = vmatpush1.bf16.msra.mxu0 %v253
    %272 = vmatprep.subr.bf16.mxu0 0
    %273 = vmatpush1.bf16.msra.mxu0 %v254
    %274 = vmatprep.subr.bf16.mxu0 0
    %275 = vmatpush1.bf16.msra.mxu0 %v255
    %276 = vmatprep.subr.bf16.mxu0 0
    %277 = vmatpush1.bf16.msra.mxu0 %v256
    %278 = vmatprep.subr.bf16.mxu0 0
    %279 = vmatpush1.bf16.msra.mxu0 %v257
    %280 = vmatprep.subr.bf16.mxu0 0
    %281 = vmatpush1.bf16.msra.mxu0 %v258
    %282 = vmatprep.subr.bf16.mxu0 0
    %283 = vmatpush1.bf16.msra.mxu0 %v259
    %284 = vmatprep.subr.bf16.mxu0 0
    %285 = vmatpush1.bf16.msra.mxu0 0
    %286 = vmatprep.subr.bf16.mxu0 0
    %287 = vmatpush1.bf16.msra.mxu0 0
    %288 = vmatprep.subr.bf16.mxu0 0
    %289 = vmatpush1.bf16.msra.mxu0 0
    %290 = vmatprep.subr.bf16.mxu0 0
    %291 = vmatpush1.bf16.msra.mxu0 0
    %292 = vmatprep.subr.bf16.mxu0 0
    %293 = vmatpush1.bf16.msra.mxu0 0
    %294 = vmatprep.subr.bf16.mxu0 0
    %295 = vmatpush1.bf16.msra.mxu0 0
    %296 = vmatprep.subr.bf16.mxu0 0
    %297 = vmatpush1.bf16.msra.mxu0 0
    %298 = vmatprep.subr.bf16.mxu0 0
    %299 = vmatpush1.bf16.msra.mxu0 0
    %300 = vmatprep.mubr.bf16.mxu0 0
    %301 = vmatmul.mubr.bf16.gmra.mrb[0].mxu0 %v196
    %v302 = vpop.f32.mrb[0].mxu0
    %v303 = vadd.f32 %v218, %v302
    %v304 = vpop.f32.mrb[0].mxu0
    %v305 = vpop.f32.mrb[0].mxu0
    %v306 = vpop.f32.mrb[0].mxu0
    %307 = vdwg.mxu0
    %v308 = vmax.f32 %v303, 0.0
    %vm309 = vcmask 80896
    %310 = vst.msk [vmem:[#allocation5] sm:$0xff] %vm309, %v308
    // Predicated region
    $region26: #{tpu_custom_call.1} parent=1 // pred_check
      _
    $region27: #{tpu_custom_call.1} parent=1 // pred_check_branch
      %312 = sbr.rel (0) target = $region29
    $region28: #{tpu_custom_call.1} parent=1 // pred_region
      %s314 = ssub.s32 128, 128
      %315 = vsyncadd [#allocation4], %s314
      %s317 = sshll.u32 [#allocation5], 4
      %s318 = int_to_ptr.vmem [resolvable:$true] %s317
      %320 = dma.vmem_to_hbm [thread:$0]  %s318, 128, %s5, [#allocation4]
    $region29: #{tpu_custom_call.1} parent=1 // pred_fallthru
      _
    // Predicated region
    $region30: #{tpu_custom_call.1} parent=1 // pred_check
      _
    $region31: #{tpu_custom_call.1} parent=1 // pred_check_branch
      %322 = sbr.rel (0) target = $region33
    $region32: #{tpu_custom_call.1} parent=1 // pred_region
      %323 = dma.done [#allocation4], 128
    $region33: #{tpu_custom_call.1} parent=1 // pred_fallthru
      _
    %324 = vsyncpa [#allocation3], 1
    %325 = vsyncpa [#allocation4], 1

</llo_original>
